<compile_context>
chip_gen: v7x
topology: tpu7x:2x2x1
jax: 0.10.0
libtpu: 0.0.40
codegen_flags: <defaults>
</compile_context>

<pallas_src>
import functools

import jax
import jax.numpy as jnp
from jax.experimental import pallas as pl
from jax.experimental.pallas import tpu as pltpu

_LANE = 128
_TARGET_BLOCK_BYTES = 4 * 1024 * 1024   # ~4 MiB blocks: amortizes the ~0.35us
                                        # per-step overhead even at v7x's
                                        # ~3.2 TB/s HBM; 4x (in+out, double-
                                        # buffered) = 16 MiB VMEM.
_VMEM_LIMIT_BYTES = 32 * 1024 * 1024    # explicit: v5e scoped default is 16 MiB.


def _apply_nonlin(v, nonlin_name):
    """Elementwise nonlinearity matching torch.nn.<nonlin_name>() defaults."""
    if nonlin_name is None:
        return v
    if nonlin_name == "ReLU":
        return jnp.maximum(v, 0)
    if nonlin_name == "Tanh":
        return jnp.tanh(v)
    if nonlin_name == "Sigmoid":
        # Lowers via tanh: 1 EUP op/elem -- stays memory-bound even on v7x.
        return jax.nn.sigmoid(v)
    if nonlin_name == "GELU":
        # torch.nn.GELU() default is the exact (erf) formulation; kept exact
        # for bit-parity.  (approximate=True would move work VALU->EUP on
        # v7x but changes numerics vs torch.)
        return jax.nn.gelu(v, approximate=False)
    if nonlin_name == "LeakyReLU":
        return jnp.where(v >= 0, v, 0.01 * v)       # torch default slope 0.01
    if nonlin_name == "ELU":
        return jnp.where(v > 0, v, jnp.expm1(v))    # torch default alpha=1.0
    if nonlin_name == "SiLU":
        return v * jax.nn.sigmoid(v)
    if nonlin_name == "Softplus":
        return jax.nn.softplus(v)
    raise NotImplementedError(f"nonlin_name={nonlin_name!r} not supported")


def _nonlin_kernel(x_ref, o_ref, *, nonlin_name):
    # Compute in the native input dtype (bf16-native on v6e/v7x; matches torch,
    # which computes in the tensor dtype).  Note bf16 transcendentals are less
    # precise than an f32-internal reference (tests use a loose tolerance).
    o_ref[...] = _apply_nonlin(x_ref[...], nonlin_name).astype(o_ref.dtype)


def _row_mult(itemsize):
    # Sub-32-bit dtypes pack 2/4 rows per sublane: use 8/16/32-row granularity.
    return 8 * max(1, 4 // itemsize)


def _choose_cols(n):
    """Largest power-of-two multiple of 128 (<= 8192) that divides n, else None."""
    for c in (8192, 4096, 2048, 1024, 512, 256, 128):
        if n % c == 0:
            return c
    return None


def _tensorcores_per_device():
    """2 on megacore parts (v7x/v4/v5p) where 'parallel' grid axes shard
    across TensorCores; 1 on v5e/v6e where the grid is a serial loop."""
    try:
        kind = jax.devices()[0].device_kind.lower()
    except Exception:
        return 1
    if "lite" in kind or "v5e" in kind or "v6e" in kind:
        return 1
    if any(tag in kind for tag in ("v7", "v4", "v5p")):
        return 2
    return 1


def _choose_tile_rows(rows, cols_padded, itemsize, n_cores):
    """Tile rows for a (rows, cols) slab; cols_padded = lane-padded width used
    for the VMEM budget."""
    rm = _row_mult(itemsize)
    if rows <= rm:
        return rows                        # block == full sublane extent (allowed)
    tr = (_TARGET_BLOCK_BYTES // (cols_padded * itemsize)) // rm * rm
    tr = max(rm, min(tr, (rows // rm) * rm))
    # Only on multi-TC chips: keep >= 2 grid steps so both TensorCores get a
    # share.  Smallest rm-multiple >= ceil(rows/2) is the best 2-block balance
    # achievable at sublane granularity (e.g. rows=17 -> {16,1} is inherent).
    if n_cores > 1 and pl.cdiv(rows, tr) < n_cores and rows >= n_cores * rm:
        tr = rm * pl.cdiv(pl.cdiv(rows, n_cores), rm)
    return tr


def _run_slab(slab, nonlin_name, donate):
    """Run the elementwise kernel over a 2-D slab (rows, cols)."""
    rows, cols = slab.shape
    itemsize = jnp.dtype(slab.dtype).itemsize
    cols_padded = pl.cdiv(cols, _LANE) * _LANE
    tr = _choose_tile_rows(rows, cols_padded, itemsize, _tensorcores_per_device())
    grid = (pl.cdiv(rows, tr),)

    kernel = functools.partial(_nonlin_kernel, nonlin_name=nonlin_name)
    return pl.pallas_call(
        kernel,
        out_shape=jax.ShapeDtypeStruct((rows, cols), slab.dtype),
        grid_spec=pltpu.PrefetchScalarGridSpec(
            num_scalar_prefetch=0,
            grid=grid,
            in_specs=[pl.BlockSpec((tr, cols), lambda i: (i, 0))],
            out_specs=pl.BlockSpec((tr, cols), lambda i: (i, 0)),
        ),
        compiler_params=pltpu.CompilerParams(
            dimension_semantics=("parallel",),
            vmem_limit_bytes=_VMEM_LIMIT_BYTES,
        ),
        # Same shape/dtype elementwise op: let donated inputs be updated in
        # place (no-op on traffic, halves HBM footprint when donated).
        input_output_aliases=({0: 0} if donate else {}),
    )(slab)


def nonlinearity(x, nonlin_name=None, *, donate_input=False):
    """Pallas equivalent of NonLinearity(nonlin_name)(x). Works on any shape."""
    if nonlin_name is None:
        return x

    orig_shape = x.shape
    n = x.size
    if n == 0:
        return x
    itemsize = jnp.dtype(x.dtype).itemsize
    rm = _row_mult(itemsize)

    # Fast path: n is a multiple of 128 -> pure metadata reshape into a
    # lane-dense (rows, cols<=8192) slab.  1 HBM read + 1 write.
    cols = _choose_cols(n)
    if cols is not None:
        out = _run_slab(x.reshape(n // cols, cols), nonlin_name, donate_input)
        return out.reshape(orig_shape)

    # Ragged size, path A: keep the trailing dim as a full-extent lane block
    # (allowed even when not a multiple of 128) and collapse leading dims.
    # Still metadata-only: 1 read + 1 write, no pad/slice/concat.
    last = orig_shape[-1] if len(orig_shape) >= 1 else n
    cols_padded = pl.cdiv(last, _LANE) * _LANE
    if cols_padded * rm * itemsize <= _TARGET_BLOCK_BYTES:
        out = _run_slab(x.reshape(n // last, last), nonlin_name, donate_input)
        return out.reshape(orig_shape)

    # Path B fallback (e.g. a single huge unaligned trailing dim): pad a flat
    # copy to an aligned size, run the fast-path kernel, slice back.
    # TODO(synk): ~3 HBM passes; could be 1+1 with a masked exact-size store.
    quantum = _LANE * rm
    padded_n = pl.cdiv(n, quantum) * quantum
    flat = jnp.pad(x.reshape(-1), (0, padded_n - n))
    cols = _choose_cols(padded_n)
    out = _run_slab(flat.reshape(padded_n // cols, cols), nonlin_name, False)
    return out.reshape(-1)[:n].reshape(orig_shape)


class NonLinearity:
    """Mirror of the PyTorch module, backed by the Pallas kernel."""

    def __init__(self, nonlin_name=None):
        self.nonlin_name = nonlin_name

    def __call__(self, x, *, donate_input=False):
        if self.nonlin_name is None:
            return x  # identity, matches PyTorch short-circuit
        return nonlinearity(x, self.nonlin_name, donate_input=donate_input)


if __name__ == "__main__":
    key = jax.random.PRNGKey(0)
    x = jax.random.normal(key, (2, 4, 16, 16), dtype=jnp.float32)  # NCHW

    # None -> identity
    ident = jax.block_until_ready(NonLinearity(None)(x))
    assert ident.shape == x.shape and bool(jnp.all(ident == x))

    # ReLU via the Pallas kernel (fast path: 2048 elems, no pad)
    relu_out = jax.block_until_ready(NonLinearity("ReLU")(x))
    assert relu_out.shape == x.shape
    assert bool(jnp.allclose(relu_out, jnp.maximum(x, 0.0), atol=1e-6))

    # Tanh via the Pallas kernel
    tanh_out = jax.block_until_ready(NonLinearity("Tanh")(x))
    assert bool(jnp.allclose(tanh_out, jnp.tanh(x), atol=1e-6))

    # Larger input: wide (8192-lane) slab; 2-way split only on megacore parts.
    xb = jax.random.normal(jax.random.PRNGKey(1), (8, 64, 32, 32), jnp.float32)
    gelu_out = jax.block_until_ready(NonLinearity("GELU")(xb))
    assert bool(jnp.allclose(gelu_out, jax.nn.gelu(xb, approximate=False),
                             atol=1e-5))

    # bf16 input: computed in bf16 in-kernel (no f32 upcast) -> loose atol.
    xh = xb.astype(jnp.bfloat16)
    silu_out = jax.block_until_ready(NonLinearity("SiLU")(xh))
    assert silu_out.dtype == jnp.bfloat16
    assert bool(jnp.allclose(silu_out.astype(jnp.float32),
                             (xh * jax.nn.sigmoid(xh)).astype(jnp.float32),
                             atol=2e-2))

    # Ragged size, path A (small): (3,5,7) -> (15, 7) slab, full-dim lane block.
    xr = jax.random.normal(jax.random.PRNGKey(2), (3, 5, 7), jnp.float32)
    sig_out = jax.block_until_ready(NonLinearity("Sigmoid")(xr))
    assert sig_out.shape == xr.shape
    assert bool(jnp.allclose(sig_out, jax.nn.sigmoid(xr), atol=1e-6))

    # Ragged size, path A (bigger): 64*33*99 elems, not a multiple of 128;
    # collapses to a (2112, 99) slab -- single pass, no pad/slice.
    xr2 = jax.random.normal(jax.random.PRNGKey(4), (64, 33, 99), jnp.float32)
    tanh2 = jax.block_until_ready(NonLinearity("Tanh")(xr2))
    assert tanh2.shape == xr2.shape
    assert bool(jnp.allclose(tanh2, jnp.tanh(xr2), atol=1e-6))

    # Ragged size, path B fallback: huge unaligned trailing dim.
    xr3 = jax.random.normal(jax.random.PRNGKey(5), (140001,), jnp.float32)
    relu3 = jax.block_until_ready(NonLinearity("ReLU")(xr3))
    assert relu3.shape == xr3.shape
    assert bool(jnp.allclose(relu3, jnp.maximum(xr3, 0.0), atol=1e-6))

    # Donation / input_output_aliases smoke test (reference computed first).
    xd = jax.random.normal(jax.random.PRNGKey(3), (4, 256, 128), jnp.float32)
    relu_ref = jax.block_until_ready(jnp.maximum(xd, 0.0))
    relu_d = jax.block_until_ready(NonLinearity("ReLU")(xd, donate_input=True))
    assert bool(jnp.allclose(relu_d, relu_ref, atol=1e-6))

    print("KERNEL_OK")
</pallas_src>

<mosaic_0001>
module attributes {stable_mosaic.version = 11 : i64} {
  func.func @_nonlin_kernel(%arg0: i32, %arg1: memref<1x2048xf32, #tpu.memory_space<vmem>>, %arg2: memref<1x2048xf32, #tpu.memory_space<vmem>>) attributes {dimension_semantics = [#tpu.dimension_semantics<parallel>], iteration_bounds = array<i64: 1>, scalar_prefetch = 0 : i64, scratch_operands = 0 : i64, tpu.core_type = #tpu.core_type<tc>, window_params = [{transform_indices = @transform_0, window_bounds = array<i64: 1, 2048>}, {transform_indices = @transform_1, window_bounds = array<i64: 1, 2048>}]} {
    %c0 = arith.constant 0 : index
    %c0_0 = arith.constant 0 : index
    %0 = vector.load %arg1[%c0, %c0_0] : memref<1x2048xf32, #tpu.memory_space<vmem>>, vector<1x2048xf32>
    %cst = arith.constant 0.000000e+00 : f32
    %1 = vector.broadcast %cst : f32 to vector<1x2048xf32>
    %2 = arith.maximumf %0, %1 : vector<1x2048xf32>
    %c0_1 = arith.constant 0 : index
    %c0_2 = arith.constant 0 : index
    %3 = vector.load %arg2[%c0_1, %c0_2] : memref<1x2048xf32, #tpu.memory_space<vmem>>, vector<1x2048xf32>
    tpu.vector_store %arg2[%c0_1, %c0_2], %2 {strides = array<i32>} : memref<1x2048xf32, #tpu.memory_space<vmem>>, vector<1x2048xf32>,
    return
  }
  func.func @transform_0(%arg0: i32) -> (i32, i32) {
    %c0_i32 = arith.constant 0 : i32
    %c0_i32_0 = arith.constant 0 : i32
    return %arg0, %c0_i32 : i32, i32
  }
  func.func @transform_1(%arg0: i32) -> (i32, i32) {
    %c0_i32 = arith.constant 0 : i32
    %c0_i32_0 = arith.constant 0 : i32
    return %arg0, %c0_i32 : i32, i32
  }
}

</mosaic_0001>

<llo_original>
// kernel: tpu_custom_call.1
$region0: #{tpu_custom_call.1}
  #allocation0 [shape = 'u32[]', space=smem, size = 0x4, offset = 0x4, fixed_abs, tag = 'smem constant byte address 0x4 - core index']
  #allocation1 [shape = 'u32[144,128]{1,0:T(1,128)}', space=vmem, size = 0x12000, scoped, tag = 'internal scratch']
  %s0 = inlined_call_operand.hbm [shape: f32[1,2048], index: 0, kind: input, shape index: {}]
  %s1 = inlined_call_operand.hbm [shape: f32[1,2048], index: 1, kind: output, shape index: {}]
  %s2 = sld [smem:[#allocation0]]
  $region18: #{tpu_custom_call.1} parent=0
    _
  %s4 = ssub.s32 1, %s2
  %s5 = scalar_select 0, %s4, %s2
  $region1: #{tpu_custom_call.1} parent=0
    #allocation2 [shape = 'u8[8192]{0}', space=vmem, size = 0x2000, scoped, tag = 'input window, operand 0, single buffered']
    #allocation3 [shape = 's32[1]{0}', space=sflag, size = 0x4, scoped, tag = 'scoped memory for tpu_custom_call.1']
    #allocation4 [shape = 's32[1]{0}', space=sflag, size = 0x4, scoped, tag = 'scoped memory for tpu_custom_call.1']
    #allocation5 [shape = 'u8[8192]{0}', space=vmem, size = 0x2000, scoped, tag = 'output window, operand 0, single buffered']
    %6 = vsyncpa [#allocation3], 0
    %7 = vsyncpa [#allocation4], 0
    // Predicated region
    $region2: #{tpu_custom_call.1} parent=1 // pred_check
      _
    $region3: #{tpu_custom_call.1} parent=1 // pred_check_branch
      %9 = sbr.rel (0) target = $region5
    $region4: #{tpu_custom_call.1} parent=1 // pred_region
      %s11 = ssub.s32 256, 256
      %12 = vsyncadd [#allocation3], %s11
      %s14 = sshll.u32 [#allocation2], 4
      %s15 = int_to_ptr.vmem [resolvable:$true] %s14
      %17 = dma.hbm_to_vmem [thread:$0]  %s0, 256, %s15, [#allocation3]
    $region5: #{tpu_custom_call.1} parent=1 // pred_fallthru
      _
    // Predicated region
    $region6: #{tpu_custom_call.1} parent=1 // pred_check
      _
    $region7: #{tpu_custom_call.1} parent=1 // pred_check_branch
      %19 = sbr.rel (0) target = $region9
    $region8: #{tpu_custom_call.1} parent=1 // pred_region
      %20 = dma.done [#allocation3], 256
    $region9: #{tpu_custom_call.1} parent=1 // pred_fallthru
      _
    %v21 = vld [vmem:[#allocation2] sm:$0xff]
    %v22 = vld [vmem:[#allocation2 + $0x8] sm:$0xff]
    %v23 = vmax.f32 %v21, 0.0
    %v24 = vmax.f32 %v22, 0.0
    %25 = vst [vmem:[#allocation5] sm:$0xff] %v23
    %26 = vst [vmem:[#allocation5 + $0x8] sm:$0xff] %v24
    // Predicated region
    $region10: #{tpu_custom_call.1} parent=1 // pred_check
      _
    $region11: #{tpu_custom_call.1} parent=1 // pred_check_branch
      %28 = sbr.rel (0) target = $region13
    $region12: #{tpu_custom_call.1} parent=1 // pred_region
      %s30 = ssub.s32 256, 256
      %31 = vsyncadd [#allocation4], %s30
      %s33 = sshll.u32 [#allocation5], 4
      %s34 = int_to_ptr.vmem [resolvable:$true] %s33
      %36 = dma.vmem_to_hbm [thread:$0]  %s34, 256, %s1, [#allocation4]
    $region13: #{tpu_custom_call.1} parent=1 // pred_fallthru
      _
    // Predicated region
    $region14: #{tpu_custom_call.1} parent=1 // pred_check
      _
    $region15: #{tpu_custom_call.1} parent=1 // pred_check_branch
      %38 = sbr.rel (0) target = $region17
    $region16: #{tpu_custom_call.1} parent=1 // pred_region
      %39 = dma.done [#allocation4], 256
    $region17: #{tpu_custom_call.1} parent=1 // pred_fallthru
      _
    %40 = vsyncpa [#allocation3], 1
    %41 = vsyncpa [#allocation4], 1

</llo_original>
